<compile_context>
chip_gen: v5e
topology: v5e:2x2
jax: 0.10.0
libtpu: 0.0.40
codegen_flags: <defaults>
</compile_context>

<pallas_src>
import math
from functools import partial

import numpy as np
import jax
import jax.numpy as jnp
from jax.experimental import pallas as pl
from jax.experimental.pallas import tpu as pltpu


NEG_HALF_MAX = -0.5 * float(np.finfo(np.float32).max)   # == max_neg_value(q) / 2


# ----------------------------------------------------------------------------
# Linear kernels (bf16 MXU inputs, f32 accumulation)
# ----------------------------------------------------------------------------

def _linear_kernel(x_ref, w_ref, o_ref):
    acc = jnp.dot(x_ref[...].astype(jnp.bfloat16),
                  w_ref[...].astype(jnp.bfloat16),
                  preferred_element_type=jnp.float32)
    o_ref[...] = acc.astype(o_ref.dtype)


def _linear_bias_kernel(x_ref, w_ref, b_ref, o_ref):
    acc = jnp.dot(x_ref[...].astype(jnp.bfloat16),
                  w_ref[...].astype(jnp.bfloat16),
                  preferred_element_type=jnp.float32)
    o_ref[...] = (acc + b_ref[...].astype(jnp.float32)).astype(o_ref.dtype)


def pallas_linear(x, w, bias=None, *, out_dtype=None, tm=256):
    """y = x @ w (+ bias), rows tiled with a fixed, pipeline-friendly tm."""
    M, K = x.shape
    Kw, N = w.shape
    assert K == Kw
    out_dtype = out_dtype if out_dtype is not None else x.dtype

    Mp = ((M + tm - 1) // tm) * tm          # pad rows instead of silently re-tiling
    if Mp != M:
        x = jnp.pad(x, ((0, Mp - M), (0, 0)))

    in_specs = [pl.BlockSpec((tm, K), lambda i: (i, 0)),
                pl.BlockSpec((K, N), lambda i: (0, 0))]
    args = [x, w]
    if bias is not None:
        in_specs.append(pl.BlockSpec((1, N), lambda i: (0, 0)))
        args.append(bias.reshape(1, N).astype(jnp.float32))
        kernel = _linear_bias_kernel
    else:
        kernel = _linear_kernel                 # no pointless zero-bias DMA

    out = pl.pallas_call(
        kernel,
        out_shape=jax.ShapeDtypeStruct((Mp, N), out_dtype),
        grid=(Mp // tm,),
        in_specs=in_specs,
        out_specs=pl.BlockSpec((tm, N), lambda i: (i, 0)),
        compiler_params=pltpu.CompilerParams(dimension_semantics=("parallel",)),
    )(*args)
    return out[:M] if Mp != M else out


# ----------------------------------------------------------------------------
# Block-sparse flash attention kernel
# ----------------------------------------------------------------------------

def _sparse_attn_kernel(tbl_ref, cnt_ref,            # scalar-prefetch (SMEM)
                        q_ref, k_ref, v_ref, kpad_ref,
                        o_ref,
                        m_sc, l_sc, acc_sc,
                        *, scale, causal):
    qi = pl.program_id(1)       # query-block index
    s_idx = pl.program_id(2)    # slot into this query block's allowed-KV table

    H, bq, D = q_ref.shape
    bk = k_ref.shape[1]

    @pl.when(s_idx == 0)
    def _init():
        m_sc[...] = jnp.full(m_sc.shape, -jnp.inf, dtype=m_sc.dtype)
        l_sc[...] = jnp.zeros(l_sc.shape, l_sc.dtype)
        acc_sc[...] = jnp.zeros(acc_sc.shape, acc_sc.dtype)

    # Skip slots beyond this row's nnz: padded table entries repeat the last
    # valid block index, so the pipelined DMA is a no-op and compute is skipped.
    @pl.when(s_idx < cnt_ref[qi])
    def _compute():
        q = q_ref[...]                                  # (H, bq, D) bf16
        k = k_ref[...]                                  # (H, bk, D) bf16
        v = v_ref[...]                                  # (H, bk, D) bf16

        s = jnp.einsum('hqd,hkd->hqk', q, k,
                       preferred_element_type=jnp.float32) * scale   # (H,bq,bk) f32

        # masks generated in-kernel (no (Np,Np) bias tensor anywhere)
        kv_blk = tbl_ref[qi, s_idx]
        bad = (kpad_ref[...] == 0.0)                    # (1, bk) key padding
        if causal:
            q_pos = qi * bq + jax.lax.broadcasted_iota(jnp.int32, (bq, bk), 0)
            k_pos = kv_blk * bk + jax.lax.broadcasted_iota(jnp.int32, (bq, bk), 1)
            bad = jnp.logical_or(bad, k_pos > q_pos)    # (bq, bk)
        s = s + jnp.where(bad, NEG_HALF_MAX, 0.0)[None]

        # online softmax update (all math in f32)
        m_prev = m_sc[...]                              # (H, bq, 1)
        m_new = jnp.maximum(m_prev, jnp.max(s, axis=-1, keepdims=True))
        alpha = jnp.exp(m_prev - m_new)
        p = jnp.exp(s - m_new)                          # (H, bq, bk)
        l_sc[...] = alpha * l_sc[...] + jnp.sum(p, axis=-1, keepdims=True)
        acc_sc[...] = alpha * acc_sc[...] + jnp.einsum(
            'hqk,hkd->hqd', p.astype(v.dtype), v,
            preferred_element_type=jnp.float32)
        m_sc[...] = m_new

    @pl.when(s_idx == pl.num_programs(2) - 1)
    def _finalize():
        inv_l = pl.reciprocal(l_sc[...], approx=True)   # (H, bq, 1)
        out = acc_sc[...] * inv_l                       # (H, bq, D) f32
        for h in range(H):                              # lane-dense (bq, H*D) tile
            o_ref[:, h * D:(h + 1) * D] = out[h].astype(o_ref.dtype)


def sparse_flash_attention(q, k, v, kpad, tbl, cnt, *, scale, causal, block_size):
    """q,k,v: (B, H, Np, D); kpad: (B, NB, 1, bs) float {0,1};
    tbl: (NB, S) int32 allowed-KV-block table; cnt: (NB,) int32 -> (B, Np, H*D)."""
    B, H, Np, D = q.shape
    NB, S = tbl.shape
    bq = bk = block_size

    grid_spec = pltpu.PrefetchScalarGridSpec(
        num_scalar_prefetch=2,
        grid=(B, NB, S),
        in_specs=[
            # squeezed leading dims -> kernel sees clean (H, bq, D) refs
            pl.BlockSpec((None, H, bq, D), lambda b, qi, s, tbl, cnt: (b, 0, qi, 0)),
            pl.BlockSpec((None, H, bk, D),
                         lambda b, qi, s, tbl, cnt: (b, 0, tbl[qi, s], 0)),
            pl.BlockSpec((None, H, bk, D),
                         lambda b, qi, s, tbl, cnt: (b, 0, tbl[qi, s], 0)),
            pl.BlockSpec((None, None, 1, bk),
                         lambda b, qi, s, tbl, cnt: (b, tbl[qi, s], 0, 0)),
        ],
        out_specs=pl.BlockSpec((None, bq, H * D),
                               lambda b, qi, s, tbl, cnt: (b, qi, 0)),
        scratch_shapes=[
            pltpu.VMEM((H, bq, 1), jnp.float32),   # m
            pltpu.VMEM((H, bq, 1), jnp.float32),   # l
            pltpu.VMEM((H, bq, D), jnp.float32),   # acc
        ],
    )
    return pl.pallas_call(
        partial(_sparse_attn_kernel, scale=scale, causal=causal),
        out_shape=jax.ShapeDtypeStruct((B, Np, H * D), q.dtype),
        grid_spec=grid_spec,
        compiler_params=pltpu.CompilerParams(
            dimension_semantics=("parallel", "parallel", "arbitrary")),
    )(tbl, cnt, q, k, v, kpad)


# ----------------------------------------------------------------------------
# Block-sparse layout (approximation of DeepSpeed VariableSparsityConfig)
# ----------------------------------------------------------------------------

def build_block_sparse_tables(num_blocks, *, causal, global_blocks,
                              num_random_blocks, local_window_blocks=4, seed=0):
    layout = np.zeros((num_blocks, num_blocks), dtype=bool)
    w = local_window_blocks
    for start in range(0, num_blocks, w):
        end = min(start + w, num_blocks)
        layout[start:end, start:end] = True
    for g in global_blocks:
        if g < num_blocks:
            layout[:, g] = True
            layout[g, :] = True
    # TODO(synk): DeepSpeed selects random blocks with torch.randperm (non-reproducible);
    # replaced with a fixed numpy seed so the layout is deterministic.
    rng = np.random.RandomState(seed)
    for i in range(num_blocks):
        hi = i + 1 if causal else num_blocks
        picks = rng.permutation(hi)[:num_random_blocks]
        layout[i, picks] = True
    if causal:
        layout &= np.tril(np.ones((num_blocks, num_blocks), dtype=bool))
    np.fill_diagonal(layout, True)     # safety: every row has >= 1 allowed block

    rows = [np.flatnonzero(layout[i]) for i in range(num_blocks)]
    counts = np.array([len(r) for r in rows], dtype=np.int32)
    max_nnz = int(counts.max())
    tbl = np.zeros((num_blocks, max_nnz), dtype=np.int32)
    for i, r in enumerate(rows):
        tbl[i, :len(r)] = r
        if len(r) < max_nnz:
            tbl[i, len(r):] = r[-1]    # repeat last valid block: pipelined DMA no-op
    return jnp.asarray(tbl), jnp.asarray(counts)


# ----------------------------------------------------------------------------
# SparseAttention module (forward pass)
# ----------------------------------------------------------------------------

class SparseAttentionPallas:
    def __init__(self, dim, seq_len, heads=8, dim_head=64, causal=True,
                 block_size=16, text_seq_len=256, num_random_blocks=None,
                 key=None):
        if key is None:
            key = jax.random.PRNGKey(0)
        self.dim = dim
        self.seq_len = seq_len
        self.heads = heads
        self.dim_head = dim_head
        self.causal = causal
        self.block_size = block_size
        self.inner_dim = heads * dim_head
        self.scale = dim_head ** -0.5
        if num_random_blocks is None:
            num_random_blocks = seq_len // block_size // 4
        self.num_random_blocks = num_random_blocks
        self.global_blocks = list(range(math.ceil(text_seq_len / block_size)))
        self._table_cache = {}

        k1, k2, k3 = jax.random.split(key, 3)
        bq = 1.0 / math.sqrt(dim)
        bo = 1.0 / math.sqrt(self.inner_dim)
        # weights stored as (in_features, out_features) so y = x @ w (+ b)
        self.w_qkv = jax.random.uniform(k1, (dim, self.inner_dim * 3),
                                        jnp.float32, -bq, bq)
        self.w_out = jax.random.uniform(k2, (self.inner_dim, dim),
                                        jnp.float32, -bo, bo)
        self.b_out = jax.random.uniform(k3, (dim,), jnp.float32, -bo, bo)

    def _get_tables(self, num_blocks):
        if num_blocks not in self._table_cache:
            self._table_cache[num_blocks] = build_block_sparse_tables(
                num_blocks, causal=self.causal, global_blocks=self.global_blocks,
                num_random_blocks=self.num_random_blocks)
        return self._table_cache[num_blocks]

    def __call__(self, x, mask=None, rotary_pos_emb=None):
        # TODO(synk): rotary_pos_emb path (apply_rotary_emb) not implemented; the
        # reference default (None) is the only path exercised here.
        assert rotary_pos_emb is None
        B, n, _ = x.shape
        bs = self.block_size
        if mask is None:
            mask = jnp.ones((B, n), dtype=bool)
        remainder = n % bs
        if remainder > 0:
            pad = bs - remainder
            x = jnp.pad(x, ((0, 0), (0, pad), (0, 0)))
            mask = jnp.pad(mask, ((0, 0), (0, pad)), constant_values=False)
        Np = x.shape[1]
        H, D = self.heads, self.dim_head
        NB = Np // bs

        # static block-sparse layout tables (SMEM scalar prefetch)
        tbl, cnt = self._get_tables(NB)

        # --- qkv projection (no bias), bf16 activations for half the K/V DMA ---
        qkv = pallas_linear(x.reshape(B * Np, self.dim), self.w_qkv,
                            bias=None, out_dtype=jnp.bfloat16)
        qkv = qkv.reshape(B, Np, 3, H, D)
        q = jnp.transpose(qkv[:, :, 0], (0, 2, 1, 3))   # (B, H, Np, D)
        k = jnp.transpose(qkv[:, :, 1], (0, 2, 1, 3))
        v = jnp.transpose(qkv[:, :, 2], (0, 2, 1, 3))

        # key-padding mask as a tiny per-KV-block float input (no (B,Np,Np) bias)
        kpad = mask.astype(jnp.float32).reshape(B, NB, 1, bs)

        # --- block-sparse flash attention, lane-dense (B, Np, H*D) output ---
        attn_out = sparse_flash_attention(
            q, k, v, kpad, tbl, cnt,
            scale=self.scale, causal=self.causal, block_size=bs)

        # --- output projection (+bias); Dropout(p=0) is identity ---
        out = pallas_linear(attn_out.reshape(B * Np, self.inner_dim),
                            self.w_out, bias=self.b_out, out_dtype=x.dtype)
        out = out.reshape(B, Np, self.dim)
        return out[:, :n]


if __name__ == "__main__":
    key = jax.random.PRNGKey(0)
    k_param, k_x = jax.random.split(key)

    B, n, dim = 2, 72, 32
    heads, dim_head = 2, 16
    seq_len, block_size, text_seq_len = 128, 16, 32

    module = SparseAttentionPallas(dim, seq_len, heads=heads, dim_head=dim_head,
                                   causal=True, block_size=block_size,
                                   text_seq_len=text_seq_len, key=k_param)

    x = jax.random.normal(k_x, (B, n, dim), dtype=jnp.float32)
    mask = jnp.ones((B, n), dtype=bool).at[1, -5:].set(False)

    out = module(x, mask=mask)
    out = jax.block_until_ready(out)

    assert out.shape == (B, n, dim), out.shape
    assert bool(jnp.all(jnp.isfinite(out)))
    print("KERNEL_OK")
</pallas_src>

<mosaic_0001>
module attributes {stable_mosaic.version = 11 : i64} {
  func.func @_linear_kernel(%arg0: i32, %arg1: memref<256x32xf32, #tpu.memory_space<vmem>>, %arg2: memref<32x96xf32, #tpu.memory_space<vmem>>, %arg3: memref<256x96xbf16, #tpu.memory_space<vmem>>) attributes {dimension_semantics = [#tpu.dimension_semantics<parallel>], iteration_bounds = array<i64: 1>, scalar_prefetch = 0 : i64, scratch_operands = 0 : i64, tpu.core_type = #tpu.core_type<tc>, window_params = [{transform_indices = @transform_0, window_bounds = array<i64: 256, 32>}, {pipeline_mode = #tpu.pipeline_mode<synchronous>, transform_indices = @transform_1, window_bounds = array<i64: 32, 96>}, {transform_indices = @transform_2, window_bounds = array<i64: 256, 96>}]} {
    %c0 = arith.constant 0 : index
    %c0_0 = arith.constant 0 : index
    %0 = vector.load %arg1[%c0, %c0_0] : memref<256x32xf32, #tpu.memory_space<vmem>>, vector<256x32xf32>
    %1 = arith.truncf %0 : vector<256x32xf32> to vector<256x32xbf16>
    %c0_1 = arith.constant 0 : index
    %c0_2 = arith.constant 0 : index
    %2 = vector.load %arg2[%c0_1, %c0_2] : memref<32x96xf32, #tpu.memory_space<vmem>>, vector<32x96xf32>
    %3 = arith.truncf %2 : vector<32x96xf32> to vector<32x96xbf16>
    %cst = arith.constant dense<0.000000e+00> : vector<256x96xf32>
    %4 = tpu.matmul %1, %3, %cst {dimension_numbers = #tpu.dot_dimension_numbers<[1], [0], [0], [1], [0, 0, 1, 1], [], []>} : vector<256x32xbf16>, vector<32x96xbf16>, vector<256x96xf32> -> vector<256x96xf32>
    %5 = arith.truncf %4 : vector<256x96xf32> to vector<256x96xbf16>
    %c0_3 = arith.constant 0 : index
    %c0_4 = arith.constant 0 : index
    %6 = vector.load %arg3[%c0_3, %c0_4] : memref<256x96xbf16, #tpu.memory_space<vmem>>, vector<256x96xbf16>
    tpu.vector_store %arg3[%c0_3, %c0_4], %5 {strides = array<i32>} : memref<256x96xbf16, #tpu.memory_space<vmem>>, vector<256x96xbf16>,
    return
  }
  func.func @transform_0(%arg0: i32) -> (i32, i32) {
    %c0_i32 = arith.constant 0 : i32
    %c0_i32_0 = arith.constant 0 : i32
    return %arg0, %c0_i32 : i32, i32
  }
  func.func @transform_1(%arg0: i32) -> (i32, i32) {
    %c0_i32 = arith.constant 0 : i32
    %c0_i32_0 = arith.constant 0 : i32
    %c0_i32_1 = arith.constant 0 : i32
    return %c0_i32, %c0_i32_0 : i32, i32
  }
  func.func @transform_2(%arg0: i32) -> (i32, i32) {
    %c0_i32 = arith.constant 0 : i32
    %c0_i32_0 = arith.constant 0 : i32
    return %arg0, %c0_i32 : i32, i32
  }
}

</mosaic_0001>

<llo_original>
// kernel: tpu_custom_call.1
$region0: #{tpu_custom_call.1}
  #allocation0 [shape = 'u32[]', space=smem, size = 0x4, offset = 0x4, fixed_abs, tag = 'smem constant byte address 0x4 - core index']
  #allocation1 [shape = 'u32[72,128]{1,0:T(1,128)}', space=vmem, size = 0x9000, scoped, tag = 'internal scratch']
  %s0 = inlined_call_operand.vmem [shape: f32[256,32], index: 0, kind: input, shape index: {}]
  %s1 = inlined_call_operand.vmem [shape: f32[32,96], index: 1, kind: input, shape index: {}]
  %s2 = inlined_call_operand.vmem [shape: bf16[256,96], index: 2, kind: output, shape index: {}]
  %s3 = sld [smem:[#allocation0]]
  $region18: #{tpu_custom_call.1} parent=0
    _
  %s5 = ssub.s32 1, %s3
  %s6 = scalar_select 0, %s5, %s3
  // Predicated region
  $region2: #{tpu_custom_call.1} parent=0 // pred_check
    _
  $region3: #{tpu_custom_call.1} parent=0 // pred_check_branch
    %8 = sbr.rel (0) target = $region5
  $region4: #{tpu_custom_call.1} parent=0 // pred_region
    _
  $region5: #{tpu_custom_call.1} parent=0 // pred_fallthru
    _
  // Predicated region
  $region6: #{tpu_custom_call.1} parent=0 // pred_check
    _
  $region7: #{tpu_custom_call.1} parent=0 // pred_check_branch
    %10 = sbr.rel (0) target = $region9
  $region8: #{tpu_custom_call.1} parent=0 // pred_region
    _
  $region9: #{tpu_custom_call.1} parent=0 // pred_fallthru
    _
  %v12 = vld [vmem:[%s0] sm:$0xff]
  %v13 = vld [vmem:[%s0 + $0x8] sm:$0xff]
  %v14 = vld [vmem:[%s0 + $0x10] sm:$0xff]
  %v15 = vld [vmem:[%s0 + $0x18] sm:$0xff]
  %v16 = vld [vmem:[%s0 + $0x20] sm:$0xff]
  %v17 = vld [vmem:[%s0 + $0x28] sm:$0xff]
  %v18 = vld [vmem:[%s0 + $0x30] sm:$0xff]
  %v19 = vld [vmem:[%s0 + $0x38] sm:$0xff]
  %v20 = vld [vmem:[%s0 + $0x40] sm:$0xff]
  %v21 = vld [vmem:[%s0 + $0x48] sm:$0xff]
  %v22 = vld [vmem:[%s0 + $0x50] sm:$0xff]
  %v23 = vld [vmem:[%s0 + $0x58] sm:$0xff]
  %v24 = vld [vmem:[%s0 + $0x60] sm:$0xff]
  %v25 = vld [vmem:[%s0 + $0x68] sm:$0xff]
  %v26 = vld [vmem:[%s0 + $0x70] sm:$0xff]
  %v27 = vld [vmem:[%s0 + $0x78] sm:$0xff]
  %v28 = vld [vmem:[%s0 + $0x80] sm:$0xff]
  %v29 = vld [vmem:[%s0 + $0x88] sm:$0xff]
  %v30 = vld [vmem:[%s0 + $0x90] sm:$0xff]
  %v31 = vld [vmem:[%s0 + $0x98] sm:$0xff]
  %v32 = vld [vmem:[%s0 + $0xa0] sm:$0xff]
  %v33 = vld [vmem:[%s0 + $0xa8] sm:$0xff]
  %v34 = vld [vmem:[%s0 + $0xb0] sm:$0xff]
  %v35 = vld [vmem:[%s0 + $0xb8] sm:$0xff]
  %v36 = vld [vmem:[%s0 + $0xc0] sm:$0xff]
  %v37 = vld [vmem:[%s0 + $0xc8] sm:$0xff]
  %v38 = vld [vmem:[%s0 + $0xd0] sm:$0xff]
  %v39 = vld [vmem:[%s0 + $0xd8] sm:$0xff]
  %v40 = vld [vmem:[%s0 + $0xe0] sm:$0xff]
  %v41 = vld [vmem:[%s0 + $0xe8] sm:$0xff]
  %v42 = vld [vmem:[%s0 + $0xf0] sm:$0xff]
  %v43 = vld [vmem:[%s0 + $0xf8] sm:$0xff]
  %v44 = vpack.c.bf16 %v13, %v12
  %v45 = vpack.c.bf16 %v15, %v14
  %v46 = vpack.c.bf16 %v17, %v16
  %v47 = vpack.c.bf16 %v19, %v18
  %v48 = vpack.c.bf16 %v21, %v20
  %v49 = vpack.c.bf16 %v23, %v22
  %v50 = vpack.c.bf16 %v25, %v24
  %v51 = vpack.c.bf16 %v27, %v26
  %v52 = vpack.c.bf16 %v29, %v28
  %v53 = vpack.c.bf16 %v31, %v30
  %v54 = vpack.c.bf16 %v33, %v32
  %v55 = vpack.c.bf16 %v35, %v34
  %v56 = vpack.c.bf16 %v37, %v36
  %v57 = vpack.c.bf16 %v39, %v38
  %v58 = vpack.c.bf16 %v41, %v40
  %v59 = vpack.c.bf16 %v43, %v42
  %v60 = vld [vmem:[%s1] sm:$0xff]
  %v61 = vld [vmem:[%s1 + $0x8] sm:$0xff]
  %v62 = vld [vmem:[%s1 + $0x10] sm:$0xff]
  %v63 = vld [vmem:[%s1 + $0x18] sm:$0xff]
  %v64 = vpack.c.bf16 %v61, %v60
  %v65 = vpack.c.bf16 %v63, %v62
  %vm66 = vcmask 261120
  %v68 = vsel %vm66, %v44, 0
  %v71 = vsel %vm66, %v45, 0
  %v74 = vsel %vm66, %v46, 0
  %v77 = vsel %vm66, %v47, 0
  %v80 = vsel %vm66, %v48, 0
  %v83 = vsel %vm66, %v49, 0
  %v86 = vsel %vm66, %v50, 0
  %v89 = vsel %vm66, %v51, 0
  %v92 = vsel %vm66, %v52, 0
  %v95 = vsel %vm66, %v53, 0
  %v98 = vsel %vm66, %v54, 0
  %v101 = vsel %vm66, %v55, 0
  %v104 = vsel %vm66, %v56, 0
  %v107 = vsel %vm66, %v57, 0
  %v110 = vsel %vm66, %v58, 0
  %v113 = vsel %vm66, %v59, 0
  %115 = vmatpush.bf16.msra.mxu0 0
  %116 = vmatpush.bf16.msra.mxu0 0
  %117 = vmatpush.bf16.msra.mxu0 0
  %118 = vmatpush.bf16.msra.mxu0 0
  %119 = vmatpush.bf16.msra.mxu0 0
  %120 = vmatpush.bf16.msra.mxu0 0
  %121 = vmatpush.bf16.msra.mxu0 %v65
  %122 = vmatpush.bf16.msra.mxu0 %v64
  %123 = vmatmul.bf16.gmra.mxu0 %v68
  %v124 = vpop.f32.mrf.mxu0
  %v125 = vadd.f32 0.0, %v124
  %v126 = vpop.f32.mrf.mxu0
  %v127 = vadd.f32 0.0, %v126
  %128 = vmatmul.bf16.gmra.mxu0 %v71
  %v129 = vpop.f32.mrf.mxu0
  %v130 = vadd.f32 0.0, %v129
  %v131 = vpop.f32.mrf.mxu0
  %v132 = vadd.f32 0.0, %v131
  %133 = vmatmul.bf16.gmra.mxu0 %v74
  %v134 = vpop.f32.mrf.mxu0
  %v135 = vadd.f32 0.0, %v134
  %v136 = vpop.f32.mrf.mxu0
  %v137 = vadd.f32 0.0, %v136
  %138 = vmatmul.bf16.gmra.mxu0 %v77
  %v139 = vpop.f32.mrf.mxu0
  %v140 = vadd.f32 0.0, %v139
  %v141 = vpop.f32.mrf.mxu0
  %v142 = vadd.f32 0.0, %v141
  %143 = vmatmul.bf16.gmra.mxu0 %v80
  %v144 = vpop.f32.mrf.mxu0
  %v145 = vadd.f32 0.0, %v144
  %v146 = vpop.f32.mrf.mxu0
  %v147 = vadd.f32 0.0, %v146
  %148 = vmatmul.bf16.gmra.mxu0 %v83
  %v149 = vpop.f32.mrf.mxu0
  %v150 = vadd.f32 0.0, %v149
  %v151 = vpop.f32.mrf.mxu0
  %v152 = vadd.f32 0.0, %v151
  %153 = vmatmul.bf16.gmra.mxu0 %v86
  %v154 = vpop.f32.mrf.mxu0
  %v155 = vadd.f32 0.0, %v154
  %v156 = vpop.f32.mrf.mxu0
  %v157 = vadd.f32 0.0, %v156
  %158 = vmatmul.bf16.gmra.mxu0 %v89
  %v159 = vpop.f32.mrf.mxu0
  %v160 = vadd.f32 0.0, %v159
  %v161 = vpop.f32.mrf.mxu0
  %v162 = vadd.f32 0.0, %v161
  %163 = vmatmul.bf16.gmra.mxu0 %v92
  %v164 = vpop.f32.mrf.mxu0
  %v165 = vadd.f32 0.0, %v164
  %v166 = vpop.f32.mrf.mxu0
  %v167 = vadd.f32 0.0, %v166
  %168 = vmatmul.bf16.gmra.mxu0 %v95
  %v169 = vpop.f32.mrf.mxu0
  %v170 = vadd.f32 0.0, %v169
  %v171 = vpop.f32.mrf.mxu0
  %v172 = vadd.f32 0.0, %v171
  %173 = vmatmul.bf16.gmra.mxu0 %v98
  %v174 = vpop.f32.mrf.mxu0
  %v175 = vadd.f32 0.0, %v174
  %v176 = vpop.f32.mrf.mxu0
  %v177 = vadd.f32 0.0, %v176
  %178 = vmatmul.bf16.gmra.mxu0 %v101
  %v179 = vpop.f32.mrf.mxu0
  %v180 = vadd.f32 0.0, %v179
  %v181 = vpop.f32.mrf.mxu0
  %v182 = vadd.f32 0.0, %v181
  %183 = vmatmul.bf16.gmra.mxu0 %v104
  %v184 = vpop.f32.mrf.mxu0
  %v185 = vadd.f32 0.0, %v184
  %v186 = vpop.f32.mrf.mxu0
  %v187 = vadd.f32 0.0, %v186
  %188 = vmatmul.bf16.gmra.mxu0 %v107
  %v189 = vpop.f32.mrf.mxu0
  %v190 = vadd.f32 0.0, %v189
  %v191 = vpop.f32.mrf.mxu0
  %v192 = vadd.f32 0.0, %v191
  %193 = vmatmul.bf16.gmra.mxu0 %v110
  %v194 = vpop.f32.mrf.mxu0
  %v195 = vadd.f32 0.0, %v194
  %v196 = vpop.f32.mrf.mxu0
  %v197 = vadd.f32 0.0, %v196
  %198 = vmatmul.bf16.gmra.mxu0 %v113
  %v199 = vpop.f32.mrf.mxu0
  %v200 = vadd.f32 0.0, %v199
  %v201 = vpop.f32.mrf.mxu0
  %v202 = vadd.f32 0.0, %v201
  %203 = vdwg.mxu0
  %v204 = vpack.c.bf16 %v125, %v125
  %v205 = vpack.c.bf16 %v127, %v127
  %v206 = vpack.c.bf16 %v130, %v130
  %v207 = vpack.c.bf16 %v132, %v132
  %v208 = vpack.c.bf16 %v135, %v135
  %v209 = vpack.c.bf16 %v137, %v137
  %v210 = vpack.c.bf16 %v140, %v140
  %v211 = vpack.c.bf16 %v142, %v142
  %v212 = vpack.c.bf16 %v145, %v145
  %v213 = vpack.c.bf16 %v147, %v147
  %v214 = vpack.c.bf16 %v150, %v150
  %v215 = vpack.c.bf16 %v152, %v152
  %v216 = vpack.c.bf16 %v155, %v155
  %v217 = vpack.c.bf16 %v157, %v157
  %v218 = vpack.c.bf16 %v160, %v160
  %v219 = vpack.c.bf16 %v162, %v162
  %v220 = vpack.c.bf16 %v165, %v165
  %v221 = vpack.c.bf16 %v167, %v167
  %v222 = vpack.c.bf16 %v170, %v170
  %v223 = vpack.c.bf16 %v172, %v172
  %v224 = vpack.c.bf16 %v175, %v175
  %v225 = vpack.c.bf16 %v177, %v177
  %v226 = vpack.c.bf16 %v180, %v180
  %v227 = vpack.c.bf16 %v182, %v182
  %v228 = vpack.c.bf16 %v185, %v185
  %v229 = vpack.c.bf16 %v187, %v187
  %v230 = vpack.c.bf16 %v190, %v190
  %v231 = vpack.c.bf16 %v192, %v192
  %v232 = vpack.c.bf16 %v195, %v195
  %v233 = vpack.c.bf16 %v197, %v197
  %v234 = vpack.c.bf16 %v200, %v200
  %v235 = vpack.c.bf16 %v202, %v202
  %vm236 = vcmask 781312
  %237 = vst.msk [vmem:[%s2] sm:$0xf] %vm236, %v204
  %238 = vst.msk [vmem:[%s2 + $0x4] sm:$0xf] %vm236, %v205
  %239 = vst.msk [vmem:[%s2 + $0x8] sm:$0xf] %vm236, %v206
  %240 = vst.msk [vmem:[%s2 + $0xc] sm:$0xf] %vm236, %v207
  %241 = vst.msk [vmem:[%s2 + $0x10] sm:$0xf] %vm236, %v208
  %242 = vst.msk [vmem:[%s2 + $0x14] sm:$0xf] %vm236, %v209
  %243 = vst.msk [vmem:[%s2 + $0x18] sm:$0xf] %vm236, %v210
  %244 = vst.msk [vmem:[%s2 + $0x1c] sm:$0xf] %vm236, %v211
  %245 = vst.msk [vmem:[%s2 + $0x20] sm:$0xf] %vm236, %v212
  %246 = vst.msk [vmem:[%s2 + $0x24] sm:$0xf] %vm236, %v213
  %247 = vst.msk [vmem:[%s2 + $0x28] sm:$0xf] %vm236, %v214
  %248 = vst.msk [vmem:[%s2 + $0x2c] sm:$0xf] %vm236, %v215
  %249 = vst.msk [vmem:[%s2 + $0x30] sm:$0xf] %vm236, %v216
  %250 = vst.msk [vmem:[%s2 + $0x34] sm:$0xf] %vm236, %v217
  %251 = vst.msk [vmem:[%s2 + $0x38] sm:$0xf] %vm236, %v218
  %252 = vst.msk [vmem:[%s2 + $0x3c] sm:$0xf] %vm236, %v219
  %253 = vst.msk [vmem:[%s2 + $0x40] sm:$0xf] %vm236, %v220
  %254 = vst.msk [vmem:[%s2 + $0x44] sm:$0xf] %vm236, %v221
  %255 = vst.msk [vmem:[%s2 + $0x48] sm:$0xf] %vm236, %v222
  %256 = vst.msk [vmem:[%s2 + $0x4c] sm:$0xf] %vm236, %v223
  %257 = vst.msk [vmem:[%s2 + $0x50] sm:$0xf] %vm236, %v224
  %258 = vst.msk [vmem:[%s2 + $0x54] sm:$0xf] %vm236, %v225
  %259 = vst.msk [vmem:[%s2 + $0x58] sm:$0xf] %vm236, %v226
  %260 = vst.msk [vmem:[%s2 + $0x5c] sm:$0xf] %vm236, %v227
  %261 = vst.msk [vmem:[%s2 + $0x60] sm:$0xf] %vm236, %v228
  %262 = vst.msk [vmem:[%s2 + $0x64] sm:$0xf] %vm236, %v229
  %263 = vst.msk [vmem:[%s2 + $0x68] sm:$0xf] %vm236, %v230
  %264 = vst.msk [vmem:[%s2 + $0x6c] sm:$0xf] %vm236, %v231
  %265 = vst.msk [vmem:[%s2 + $0x70] sm:$0xf] %vm236, %v232
  %266 = vst.msk [vmem:[%s2 + $0x74] sm:$0xf] %vm236, %v233
  %267 = vst.msk [vmem:[%s2 + $0x78] sm:$0xf] %vm236, %v234
  %268 = vst.msk [vmem:[%s2 + $0x7c] sm:$0xf] %vm236, %v235
  // Predicated region
  $region10: #{tpu_custom_call.1} parent=0 // pred_check
    _
  $region11: #{tpu_custom_call.1} parent=0 // pred_check_branch
    %270 = sbr.rel (0) target = $region13
  $region12: #{tpu_custom_call.1} parent=0 // pred_region
    _
  $region13: #{tpu_custom_call.1} parent=0 // pred_fallthru
    _
  // Predicated region
  $region14: #{tpu_custom_call.1} parent=0 // pred_check
    _
  $region15: #{tpu_custom_call.1} parent=0 // pred_check_branch
    %272 = sbr.rel (0) target = $region17
  $region16: #{tpu_custom_call.1} parent=0 // pred_region
    _
  $region17: #{tpu_custom_call.1} parent=0 // pred_fallthru
    _

</llo_original>
